<compile_context>
chip_gen: v7x
topology: tpu7x:2x2x1
jax: 0.10.0
libtpu: 0.0.40
codegen_flags: <defaults>
</compile_context>

<pallas_src>
import math

import jax
import jax.numpy as jnp
from jax.experimental import pallas as pl
from jax.experimental.pallas import tpu as pltpu

BATCH = 2
IN_CHANNELS = 4
IMG = 16
PATCH = 4
EMBED_DIM = 32
N_PATCHES = (IMG // PATCH) * (IMG // PATCH)     # 16 patches per image
K_FEAT = IN_CHANNELS * PATCH * PATCH            # 64  (im2col feature dim)


def patch_embed_kernel(p_ref, w_ref, b_ref, o_ref):
    # p_ref: (TM, K) im2col patch rows; w_ref: (K, E); b_ref: (1, E); o_ref: (TM, E)
    # f32 operands -> f32 MXU matmul (no bf16 demotion), bias broadcast-add in f32.
    o_ref[...] = (
        jnp.dot(p_ref[...], w_ref[...], preferred_element_type=jnp.float32)
        + b_ref[...]
    )


def init_params(key, in_channels=IN_CHANNELS, embed_dim=EMBED_DIM, patch_size=PATCH):
    # PyTorch nn.Conv2d default init: U(-1/sqrt(fan_in), 1/sqrt(fan_in))
    fan_in = in_channels * patch_size * patch_size
    bound = 1.0 / math.sqrt(fan_in)
    kw, kb = jax.random.split(key)
    w_conv = jax.random.uniform(
        kw, (embed_dim, in_channels, patch_size, patch_size), jnp.float32,
        -bound, bound)
    b = jax.random.uniform(kb, (embed_dim,), jnp.float32, -bound, bound)
    # Hoisted one-time relayout: (E, C, P, P) -> (C*P*P, E) so the kernel runs a plain
    # patches @ W.  Row-major (c, i, j) feature order matches the im2col below.
    w_flat = w_conv.reshape(embed_dim, fan_in).T
    return {"w_conv": w_conv, "w": w_flat, "b": b.reshape(1, embed_dim)}


def patch_embedding(x, params):
    """x: (B, C, H, W) f32 -> (B, N, E).  Equals Conv2d + flatten(2) + transpose(1,2)."""
    B, C, H, W = x.shape
    P = PATCH
    nh, nw = H // P, W // P
    N = nh * nw
    M = B * N
    K, E = params["w"].shape

    # im2col relayout (pure data movement; input-dependent so it cannot be hoisted).
    # Feature order (c, i, j) matches the weight flatten in init_params.
    # TODO(synk): at production ViT shapes, fuse this relayout into the kernel (pass x
    # with a blocked BlockSpec and relayout on the XLU slot) to save one activation-sized
    # HBM round trip; at 8 KB here a single XLA fusion is cheaper than risking a 6-D
    # in-kernel relayout lowering.
    patches = x.reshape(B, C, nh, P, nw, P).transpose(0, 2, 4, 1, 3, 5).reshape(M, K)

    # M-tiles of the fused (batch * patches) axis, full K and E per tile.  At these
    # shapes TM == M -> a single grid step / single GEMM (no per-image steps, no
    # per-step weight refetch).  At production shapes TM=512 keeps double-buffered
    # input tiles well inside v7x's 64 MiB VMEM while feeding the 256x256 MXU.
    TM = M if M <= 512 else 512
    grid_m = pl.cdiv(M, TM)

    cost = pl.CostEstimate(
        flops=2 * M * K * E,
        transcendentals=0,
        bytes_accessed=4 * (M * K + K * E + E + M * E),
    )

    out = pl.pallas_call(
        patch_embed_kernel,
        out_shape=jax.ShapeDtypeStruct((M, E), jnp.float32),
        grid=(grid_m,),
        in_specs=[
            pl.BlockSpec((TM, K), lambda m: (m, 0)),   # patch-row tile
            pl.BlockSpec((K, E), lambda m: (0, 0)),    # weight, resident across steps
            pl.BlockSpec((1, E), lambda m: (0, 0)),    # bias, resident across steps
        ],
        # E=32 -> output stores are masked to 32/128 lanes.  At production E (a multiple
        # of 128) they become full-lane `vst` automatically; padding E or an in-kernel
        # (TM,E)->(TM*E/128,128) reshape isn't worth an extra relayout for a 4 KB output.
        out_specs=pl.BlockSpec((TM, E), lambda m: (m, 0)),
        compiler_params=pltpu.CompilerParams(
            # Single-step grid here.  For production-scale M, shard this axis across
            # v7x's two TensorCores with pltpu.CORE_PARALLEL (plain "parallel" does not
            # change codegen), with >=128-row tiles per core.
            dimension_semantics=("arbitrary",),
        ),
        cost_estimate=cost,
    )(patches, params["w"], params["b"])

    # Free reshape: (B*N, E) and (B, N, E) share the same contiguous layout.
    return out.reshape(B, N, E)


if __name__ == "__main__":
    key = jax.random.PRNGKey(0)
    pkey, xkey = jax.random.split(key)
    params = init_params(pkey)
    x = jax.random.normal(xkey, (BATCH, IN_CHANNELS, IMG, IMG), jnp.float32)

    y = jax.block_until_ready(patch_embedding(x, params))
    assert y.shape == (BATCH, N_PATCHES, EMBED_DIM)
    assert bool(jnp.all(jnp.isfinite(y)))

    # Reference: the PyTorch module's exact math (f32 Conv2d -> flatten(2) -> transpose(1,2)),
    # computed at HIGHEST precision so the reference itself isn't bf16-demoted by XLA.
    ref = jax.lax.conv_general_dilated(
        x, params["w_conv"], window_strides=(PATCH, PATCH), padding="VALID",
        dimension_numbers=("NCHW", "OIHW", "NCHW"),
        precision=jax.lax.Precision.HIGHEST)
    ref = ref + params["b"].reshape(1, EMBED_DIM, 1, 1)
    ref = ref.reshape(BATCH, EMBED_DIM, N_PATCHES).transpose(0, 2, 1)
    # f32 operands in-kernel (bf16 casts removed); tolerance only needs to absorb MXU
    # f32 pass-count differences across TPU generations, not bf16 operand demotion.
    max_err = float(jnp.max(jnp.abs(y - ref)))
    assert bool(jnp.allclose(y, ref, rtol=1e-2, atol=1e-2)), max_err

    print("KERNEL_OK")
</pallas_src>

<mosaic_0001>
module attributes {stable_mosaic.version = 11 : i64} {
  func.func @patch_embed_kernel(%arg0: i32, %arg1: memref<32x64xf32, #tpu.memory_space<vmem>>, %arg2: memref<64x32xf32, #tpu.memory_space<vmem>>, %arg3: memref<1x32xf32, #tpu.memory_space<vmem>>, %arg4: memref<32x32xf32, #tpu.memory_space<vmem>>) attributes {dimension_semantics = [#tpu.dimension_semantics<arbitrary>], iteration_bounds = array<i64: 1>, scalar_prefetch = 0 : i64, scratch_operands = 0 : i64, tpu.core_type = #tpu.core_type<tc>, window_params = [{transform_indices = @transform_0, window_bounds = array<i64: 32, 64>}, {pipeline_mode = #tpu.pipeline_mode<synchronous>, transform_indices = @transform_1, window_bounds = array<i64: 64, 32>}, {pipeline_mode = #tpu.pipeline_mode<synchronous>, transform_indices = @transform_2, window_bounds = array<i64: 1, 32>}, {transform_indices = @transform_3, window_bounds = array<i64: 32, 32>}]} {
    %c0 = arith.constant 0 : index
    %c0_0 = arith.constant 0 : index
    %0 = vector.load %arg1[%c0, %c0_0] : memref<32x64xf32, #tpu.memory_space<vmem>>, vector<32x64xf32>
    %c0_1 = arith.constant 0 : index
    %c0_2 = arith.constant 0 : index
    %1 = vector.load %arg2[%c0_1, %c0_2] : memref<64x32xf32, #tpu.memory_space<vmem>>, vector<64x32xf32>
    %cst = arith.constant dense<0.000000e+00> : vector<32x32xf32>
    %2 = tpu.matmul %0, %1, %cst {dimension_numbers = #tpu.dot_dimension_numbers<[1], [0], [0], [1], [0, 0, 1, 1], [], []>} : vector<32x64xf32>, vector<64x32xf32>, vector<32x32xf32> -> vector<32x32xf32>
    %c0_3 = arith.constant 0 : index
    %c0_4 = arith.constant 0 : index
    %3 = vector.load %arg3[%c0_3, %c0_4] : memref<1x32xf32, #tpu.memory_space<vmem>>, vector<1x32xf32>
    %4 = vector.broadcast %3 : vector<1x32xf32> to vector<32x32xf32>
    %5 = arith.addf %2, %4 : vector<32x32xf32>
    %c0_5 = arith.constant 0 : index
    %c0_6 = arith.constant 0 : index
    %6 = vector.load %arg4[%c0_5, %c0_6] : memref<32x32xf32, #tpu.memory_space<vmem>>, vector<32x32xf32>
    tpu.vector_store %arg4[%c0_5, %c0_6], %5 {strides = array<i32>} : memref<32x32xf32, #tpu.memory_space<vmem>>, vector<32x32xf32>,
    return
  }
  func.func @transform_0(%arg0: i32) -> (i32, i32) {
    %c0_i32 = arith.constant 0 : i32
    %c0_i32_0 = arith.constant 0 : i32
    return %arg0, %c0_i32 : i32, i32
  }
  func.func @transform_1(%arg0: i32) -> (i32, i32) {
    %c0_i32 = arith.constant 0 : i32
    %c0_i32_0 = arith.constant 0 : i32
    %c0_i32_1 = arith.constant 0 : i32
    return %c0_i32, %c0_i32_0 : i32, i32
  }
  func.func @transform_2(%arg0: i32) -> (i32, i32) {
    %c0_i32 = arith.constant 0 : i32
    %c0_i32_0 = arith.constant 0 : i32
    %c0_i32_1 = arith.constant 0 : i32
    return %c0_i32, %c0_i32_0 : i32, i32
  }
  func.func @transform_3(%arg0: i32) -> (i32, i32) {
    %c0_i32 = arith.constant 0 : i32
    %c0_i32_0 = arith.constant 0 : i32
    return %arg0, %c0_i32 : i32, i32
  }
}

</mosaic_0001>

<llo_original>
// kernel: tpu_custom_call.1
$region0: #{tpu_custom_call.1}
  #allocation0 [shape = 'u32[]', space=smem, size = 0x4, offset = 0x4, fixed_abs, tag = 'smem constant byte address 0x4 - core index']
  #allocation1 [shape = 'u32[144,128]{1,0:T(1,128)}', space=vmem, size = 0x12000, scoped, tag = 'internal scratch']
  %s0 = inlined_call_operand.vmem [shape: f32[32,64], index: 0, kind: input, shape index: {}]
  %s1 = inlined_call_operand.vmem [shape: f32[64,32], index: 1, kind: input, shape index: {}]
  %s2 = inlined_call_operand.vmem [shape: f32[1,32], index: 2, kind: input, shape index: {}]
  %s3 = inlined_call_operand.hbm [shape: f32[32,32], index: 3, kind: output, shape index: {}]
  %s4 = sld [smem:[#allocation0]]
  $region22: #{tpu_custom_call.1} parent=0
    _
  %s6 = ssub.s32 1, %s4
  %s7 = scalar_select 0, %s6, %s4
  $region1: #{tpu_custom_call.1} parent=0
    #allocation2 [shape = 'u8[16384]{0}', space=vmem, size = 0x4000, scoped, tag = 'output window, operand 0, single buffered']
    #allocation3 [shape = 's32[1]{0}', space=sflag, size = 0x4, scoped, tag = 'scoped memory for tpu_custom_call.1']
    %8 = vsyncpa [#allocation3], 0
    // Predicated region
    $region2: #{tpu_custom_call.1} parent=1 // pred_check
      _
    $region3: #{tpu_custom_call.1} parent=1 // pred_check_branch
      %10 = sbr.rel (0) target = $region5
    $region4: #{tpu_custom_call.1} parent=1 // pred_region
      _
    $region5: #{tpu_custom_call.1} parent=1 // pred_fallthru
      _
    // Predicated region
    $region6: #{tpu_custom_call.1} parent=1 // pred_check
      _
    $region7: #{tpu_custom_call.1} parent=1 // pred_check_branch
      %12 = sbr.rel (0) target = $region9
    $region8: #{tpu_custom_call.1} parent=1 // pred_region
      _
    $region9: #{tpu_custom_call.1} parent=1 // pred_fallthru
      _
    // Predicated region
    $region10: #{tpu_custom_call.1} parent=1 // pred_check
      _
    $region11: #{tpu_custom_call.1} parent=1 // pred_check_branch
      %14 = sbr.rel (0) target = $region13
    $region12: #{tpu_custom_call.1} parent=1 // pred_region
      _
    $region13: #{tpu_custom_call.1} parent=1 // pred_fallthru
      _
    %v15 = vld [vmem:[%s0] sm:$0xff]
    %v16 = vld [vmem:[%s0 + $0x8] sm:$0xff]
    %v17 = vld [vmem:[%s0 + $0x10] sm:$0xff]
    %v18 = vld [vmem:[%s0 + $0x18] sm:$0xff]
    %v19 = vld [vmem:[%s1] sm:$0xff]
    %v20 = vld [vmem:[%s1 + $0x8] sm:$0xff]
    %v21 = vld [vmem:[%s1 + $0x10] sm:$0xff]
    %v22 = vld [vmem:[%s1 + $0x18] sm:$0xff]
    %v23 = vld [vmem:[%s1 + $0x20] sm:$0xff]
    %v24 = vld [vmem:[%s1 + $0x28] sm:$0xff]
    %v25 = vld [vmem:[%s1 + $0x30] sm:$0xff]
    %v26 = vld [vmem:[%s1 + $0x38] sm:$0xff]
    %v27 = vld [vmem:[%s2] sm:$0x1]
    %v29 = vlaneseq
    %v30 = vshrl.u32 %v29, 7
    %v31 = vsub.s32 0, %v30
    %v32 = vrot.slane %v27, %v31
    %vm34 = vcmask 523264
    %v36 = vsel %vm34, %v15, 0
    %v39 = vsel %vm34, %v16, 0
    %v42 = vsel %vm34, %v17, 0
    %v45 = vsel %vm34, %v18, 0
    %47 = vmatprep.subr.mxu0 0.0
    %48 = vmatpush1.msra.mxu0 %v19
    %49 = vmatprep.subr.mxu0 0.0
    %50 = vmatpush1.msra.mxu0 %v20
    %51 = vmatprep.subr.mxu0 0.0
    %52 = vmatpush1.msra.mxu0 %v21
    %53 = vmatprep.subr.mxu0 0.0
    %54 = vmatpush1.msra.mxu0 %v22
    %55 = vmatprep.subr.mxu0 0.0
    %56 = vmatpush1.msra.mxu0 %v23
    %57 = vmatprep.subr.mxu0 0.0
    %58 = vmatpush1.msra.mxu0 %v24
    %59 = vmatprep.subr.mxu0 0.0
    %60 = vmatpush1.msra.mxu0 %v25
    %61 = vmatprep.subr.mxu0 0.0
    %62 = vmatpush1.msra.mxu0 %v26
    %63 = vmatprep.subr.mxu0 0.0
    %64 = vmatpush1.msra.mxu0 0.0
    %65 = vmatprep.subr.mxu0 0.0
    %66 = vmatpush1.msra.mxu0 0.0
    %67 = vmatprep.subr.mxu0 0.0
    %68 = vmatpush1.msra.mxu0 0.0
    %69 = vmatprep.subr.mxu0 0.0
    %70 = vmatpush1.msra.mxu0 0.0
    %71 = vmatprep.subr.mxu0 0.0
    %72 = vmatpush1.msra.mxu0 0.0
    %73 = vmatprep.subr.mxu0 0.0
    %74 = vmatpush1.msra.mxu0 0.0
    %75 = vmatprep.subr.mxu0 0.0
    %76 = vmatpush1.msra.mxu0 0.0
    %77 = vmatprep.subr.mxu0 0.0
    %78 = vmatpush1.msra.mxu0 0.0
    %79 = vmatprep.subr.mxu0 0.0
    %80 = vmatpush1.msra.mxu0 0.0
    %81 = vmatprep.subr.mxu0 0.0
    %82 = vmatpush1.msra.mxu0 0.0
    %83 = vmatprep.subr.mxu0 0.0
    %84 = vmatpush1.msra.mxu0 0.0
    %85 = vmatprep.subr.mxu0 0.0
    %86 = vmatpush1.msra.mxu0 0.0
    %87 = vmatprep.subr.mxu0 0.0
    %88 = vmatpush1.msra.mxu0 0.0
    %89 = vmatprep.subr.mxu0 0.0
    %90 = vmatpush1.msra.mxu0 0.0
    %91 = vmatprep.subr.mxu0 0.0
    %92 = vmatpush1.msra.mxu0 0.0
    %93 = vmatprep.subr.mxu0 0.0
    %94 = vmatpush1.msra.mxu0 0.0
    %95 = vmatprep.subr.mxu0 0.0
    %96 = vmatpush1.msra.mxu0 0.0
    %97 = vmatprep.subr.mxu0 0.0
    %98 = vmatpush1.msra.mxu0 0.0
    %99 = vmatprep.subr.mxu0 0.0
    %100 = vmatpush1.msra.mxu0 0.0
    %101 = vmatprep.subr.mxu0 0.0
    %102 = vmatpush1.msra.mxu0 0.0
    %103 = vmatprep.subr.mxu0 0.0
    %104 = vmatpush1.msra.mxu0 0.0
    %105 = vmatprep.subr.mxu0 0.0
    %106 = vmatpush1.msra.mxu0 0.0
    %107 = vmatprep.subr.mxu0 0.0
    %108 = vmatpush1.msra.mxu0 0.0
    %109 = vmatprep.subr.mxu0 0.0
    %110 = vmatpush1.msra.mxu0 0.0
    %111 = vmatprep.mubr.f32.mxu0 0.0
    %112 = vmatmul.mubr.f32.gmra.mrb[0].mxu0 %v36
    %v113 = vpop.f32.mrb[0].mxu0
    %v114 = vadd.f32 %v32, %v113
    %v115 = vpop.f32.mrb[0].mxu0
    %116 = vmatprep.mubr.f32.mxu0 0.0
    %117 = vmatmul.mubr.f32.gmra.mrb[0].mxu0 %v39
    %v118 = vpop.f32.mrb[0].mxu0
    %v119 = vadd.f32 %v32, %v118
    %v120 = vpop.f32.mrb[0].mxu0
    %121 = vmatprep.mubr.f32.mxu0 0.0
    %122 = vmatmul.mubr.f32.gmra.mrb[0].mxu0 %v42
    %v123 = vpop.f32.mrb[0].mxu0
    %v124 = vadd.f32 %v32, %v123
    %v125 = vpop.f32.mrb[0].mxu0
    %126 = vmatprep.mubr.f32.mxu0 0.0
    %127 = vmatmul.mubr.f32.gmra.mrb[0].mxu0 %v45
    %v128 = vpop.f32.mrb[0].mxu0
    %v129 = vadd.f32 %v32, %v128
    %v130 = vpop.f32.mrb[0].mxu0
    %131 = vdwg.mxu0
    %vm132 = vcmask 261120
    %133 = vst.msk [vmem:[#allocation2] sm:$0xff] %vm132, %v114
    %134 = vst.msk [vmem:[#allocation2 + $0x8] sm:$0xff] %vm132, %v119
    %135 = vst.msk [vmem:[#allocation2 + $0x10] sm:$0xff] %vm132, %v124
    %136 = vst.msk [vmem:[#allocation2 + $0x18] sm:$0xff] %vm132, %v129
    // Predicated region
    $region14: #{tpu_custom_call.1} parent=1 // pred_check
      _
    $region15: #{tpu_custom_call.1} parent=1 // pred_check_branch
      %138 = sbr.rel (0) target = $region17
    $region16: #{tpu_custom_call.1} parent=1 // pred_region
      %s140 = ssub.s32 512, 512
      %141 = vsyncadd [#allocation3], %s140
      %s142 = sshll.u32 [#allocation2], 4
      %s143 = int_to_ptr.vmem [resolvable:$true] %s142
      %148 = dma.vmem_to_hbm [thread:$0]  %s143, 512, %s3, [#allocation3], 128, 128, 8
    $region17: #{tpu_custom_call.1} parent=1 // pred_fallthru
      _
    // Predicated region
    $region18: #{tpu_custom_call.1} parent=1 // pred_check
      _
    $region19: #{tpu_custom_call.1} parent=1 // pred_check_branch
      %150 = sbr.rel (0) target = $region21
    $region20: #{tpu_custom_call.1} parent=1 // pred_region
      %151 = dma.done [#allocation3], 512
    $region21: #{tpu_custom_call.1} parent=1 // pred_fallthru
      _
    %152 = vsyncpa [#allocation3], 1

</llo_original>
